<compile_context>
chip_gen: v5e
topology: v5e:2x2
jax: 0.10.0
libtpu: 0.0.40
codegen_flags: <defaults>
</compile_context>

<pallas_src>
import functools

import jax
import jax.numpy as jnp
from jax.experimental import pallas as pl
from jax.experimental.pallas import tpu as pltpu

LANE = 128
SUBLANE = 8


def _bce_kernel(x_ref, t_ref, o_ref, *, w_pos, w_neg, eps, n_valid,
                tile_rows, steps):
    s = pl.program_id(0)   # split axis (parallel — one per TensorCore on v7x)
    k = pl.program_id(1)   # reduction axis within the split (arbitrary)

    @pl.when(k == 0)
    def _():
        o_ref[...] = jnp.zeros_like(o_ref)

    # Cast happens on the VPU, hidden under the DMA bound.
    x = x_ref[...].astype(jnp.float32)
    t = t_ref[...].astype(jnp.float32)

    xc = jnp.clip(x, eps, 1.0 - eps)
    loss = (w_pos * t * jnp.log(xc)
            + w_neg * (1.0 - t) * jnp.log(1.0 - xc))

    tile_elems = tile_rows * LANE
    blk = s * steps + k                    # global (unclamped) block index
    block_end = (blk + 1) * tile_elems
    in_bounds = block_end <= n_valid       # whole block is valid data?

    # Fast path (all but at most one real block per split): plain VPU adds.
    @pl.when(in_bounds)
    def _():
        o_ref[...] += loss.reshape(tile_rows // SUBLANE, SUBLANE, LANE).sum(axis=0)

    # Slow path: block extends past valid data (tail padding / OOB-padded rows
    # or clamped extra iterations of the last split) -> mask before summing.
    @pl.when(jnp.logical_not(in_bounds))
    def _():
        row = jax.lax.broadcasted_iota(jnp.int32, (tile_rows, LANE), 0)
        col = jax.lax.broadcasted_iota(jnp.int32, (tile_rows, LANE), 1)
        flat = blk * tile_elems + row * LANE + col
        masked = jnp.where(flat < n_valid, loss, 0.0)
        o_ref[...] += masked.reshape(tile_rows // SUBLANE, SUBLANE, LANE).sum(axis=0)


def img_bce_loss(inp, target, w_pos=1.0, w_neg=1.0, eps=1e-6,
                 tile_rows=2048, num_splits=2):
    assert inp.shape == target.shape
    n_valid = int(inp.size)
    assert n_valid > 0

    # Flatten in native dtype (no wrapper-side cast — kernel casts on the VPU).
    x = jnp.ravel(inp)
    t = jnp.ravel(target)

    # Only pad when the element count is not a multiple of the lane width.
    pad = (-n_valid) % LANE
    if pad:
        x = jnp.concatenate([x, jnp.full((pad,), 0.5, x.dtype)])
        t = jnp.concatenate([t, jnp.zeros((pad,), t.dtype)])

    rows = x.shape[0] // LANE
    x2 = x.reshape(rows, LANE)   # reshape of a contiguous array: no copy
    t2 = t.reshape(rows, LANE)

    # Tile sizing: multiple of 8 sublanes, capped at the rounded-up row count.
    tile_rows = max(SUBLANE, ((tile_rows + SUBLANE - 1) // SUBLANE) * SUBLANE)
    rows_rounded = ((rows + SUBLANE - 1) // SUBLANE) * SUBLANE
    tile_rows = min(tile_rows, rows_rounded)
    tile_elems = tile_rows * LANE

    # Guard the int32 flat-index math in the kernel's mask path.
    assert n_valid < 2**31 - 4 * tile_elems, "int32 flat-index overflow"

    total_blocks = pl.cdiv(rows, tile_rows)
    num_splits = num_splits if total_blocks >= num_splits else 1
    steps = pl.cdiv(total_blocks, num_splits)

    if num_splits * steps == total_blocks:
        # Grid exactly covers the blocks.
        in_map = lambda s, k: (s * steps + k, 0)
    else:
        # Clamp so trailing (empty) iterations of the last split never index
        # past the array; their contribution is masked to zero in-kernel.
        in_map = lambda s, k: (jnp.minimum(s * steps + k, total_blocks - 1), 0)

    kernel = functools.partial(
        _bce_kernel,
        w_pos=float(w_pos), w_neg=float(w_neg), eps=float(eps),
        n_valid=n_valid, tile_rows=tile_rows, steps=steps,
    )

    partials = pl.pallas_call(
        kernel,
        out_shape=jax.ShapeDtypeStruct((num_splits * SUBLANE, LANE), jnp.float32),
        grid_spec=pltpu.PrefetchScalarGridSpec(
            num_scalar_prefetch=0,
            grid=(num_splits, steps),
            in_specs=[
                pl.BlockSpec((tile_rows, LANE), in_map),
                pl.BlockSpec((tile_rows, LANE), in_map),
            ],
            out_specs=pl.BlockSpec((SUBLANE, LANE), lambda s, k: (s, 0)),
        ),
        compiler_params=pltpu.CompilerParams(
            dimension_semantics=("parallel", "arbitrary")),
    )(x2, t2)

    # Final scalar reduction of the tiny (num_splits*8, 128) partial-sum slab.
    return -jnp.sum(partials) / jnp.float32(n_valid)


def _ref_loss(inp, target, w_pos=1.0, w_neg=1.0, eps=1e-6):
    x = jnp.clip(inp, eps, 1.0 - eps)
    loss = w_pos * target * jnp.log(x) + w_neg * (1.0 - target) * jnp.log(1.0 - x)
    return -jnp.mean(loss)


if __name__ == "__main__":
    key = jax.random.PRNGKey(0)
    k1, k2 = jax.random.split(key)
    # NCHW shapes consistent with an image probability map.
    B, C, H, W = 2, 4, 16, 16
    inp = jax.random.uniform(k1, (B, C, H, W), dtype=jnp.float32)              # probabilities
    target = (jax.random.uniform(k2, (B, C, H, W)) > 0.5).astype(jnp.float32)  # binary labels

    out = img_bce_loss(inp, target, w_pos=1.0, w_neg=1.0, eps=1e-6)
    out = jax.block_until_ready(out)

    ref = _ref_loss(inp, target)
    assert jnp.allclose(out, ref, rtol=1e-5, atol=1e-5), (out, ref)
    print("KERNEL_OK")
</pallas_src>

<mosaic_0001>
module attributes {stable_mosaic.version = 11 : i64} {
  func.func @_bce_kernel(%arg0: i32, %arg1: i32, %arg2: memref<16x128xf32, #tpu.memory_space<vmem>>, %arg3: memref<16x128xf32, #tpu.memory_space<vmem>>, %arg4: memref<8x128xf32, #tpu.memory_space<vmem>>) attributes {dimension_semantics = [#tpu.dimension_semantics<parallel>, #tpu.dimension_semantics<arbitrary>], iteration_bounds = array<i64: 1, 1>, scalar_prefetch = 0 : i64, scratch_operands = 0 : i64, tpu.core_type = #tpu.core_type<tc>, window_params = [{transform_indices = @transform_0, window_bounds = array<i64: 16, 128>}, {transform_indices = @transform_1, window_bounds = array<i64: 16, 128>}, {transform_indices = @transform_2, window_bounds = array<i64: 8, 128>}]} {
    %c0_i32 = arith.constant 0 : i32
    %0 = arith.cmpi eq, %arg1, %c0_i32 : i32
    %1 = arith.extui %0 : i1 to i32
    %c0_i32_0 = arith.constant 0 : i32
    %2 = arith.cmpi ne, %1, %c0_i32_0 : i32
    scf.if %2 {
      %cst_13 = arith.constant 0.000000e+00 : f32
      %32 = vector.broadcast %cst_13 : f32 to vector<8x128xf32>
      %c0_14 = arith.constant 0 : index
      %c0_15 = arith.constant 0 : index
      %33 = vector.load %arg4[%c0_14, %c0_15] : memref<8x128xf32, #tpu.memory_space<vmem>>, vector<8x128xf32>
      tpu.vector_store %arg4[%c0_14, %c0_15], %32 {strides = array<i32>} : memref<8x128xf32, #tpu.memory_space<vmem>>, vector<8x128xf32>,
    } else {
    }
    %c0 = arith.constant 0 : index
    %c0_1 = arith.constant 0 : index
    %3 = vector.load %arg2[%c0, %c0_1] : memref<16x128xf32, #tpu.memory_space<vmem>>, vector<16x128xf32>
    %c0_2 = arith.constant 0 : index
    %c0_3 = arith.constant 0 : index
    %4 = vector.load %arg3[%c0_2, %c0_3] : memref<16x128xf32, #tpu.memory_space<vmem>>, vector<16x128xf32>
    %cst = arith.constant 9.99999997E-7 : f32
    %cst_4 = arith.constant 0.999998986 : f32
    %5 = vector.broadcast %cst : f32 to vector<16x128xf32>
    %6 = arith.maximumf %5, %3 : vector<16x128xf32>
    %7 = vector.broadcast %cst_4 : f32 to vector<16x128xf32>
    %8 = arith.minimumf %7, %6 : vector<16x128xf32>
    %cst_5 = arith.constant 1.000000e+00 : f32
    %9 = vector.broadcast %cst_5 : f32 to vector<16x128xf32>
    %10 = arith.mulf %9, %4 : vector<16x128xf32>
    %11 = math.log %8 : vector<16x128xf32>
    %12 = arith.mulf %10, %11 : vector<16x128xf32>
    %cst_6 = arith.constant 1.000000e+00 : f32
    %13 = vector.broadcast %cst_6 : f32 to vector<16x128xf32>
    %14 = arith.subf %13, %4 : vector<16x128xf32>
    %cst_7 = arith.constant 1.000000e+00 : f32
    %15 = vector.broadcast %cst_7 : f32 to vector<16x128xf32>
    %16 = arith.mulf %15, %14 : vector<16x128xf32>
    %cst_8 = arith.constant 1.000000e+00 : f32
    %17 = vector.broadcast %cst_8 : f32 to vector<16x128xf32>
    %18 = arith.subf %17, %8 : vector<16x128xf32>
    %19 = math.log %18 : vector<16x128xf32>
    %20 = arith.mulf %16, %19 : vector<16x128xf32>
    %21 = arith.addf %12, %20 : vector<16x128xf32>
    %c1_i32 = arith.constant 1 : i32
    %22 = arith.muli %arg0, %c1_i32 : i32
    %23 = arith.addi %22, %arg1 : i32
    %c1_i32_9 = arith.constant 1 : i32
    %24 = arith.addi %23, %c1_i32_9 : i32
    %c2048_i32 = arith.constant 2048 : i32
    %25 = arith.muli %24, %c2048_i32 : i32
    %c2048_i32_10 = arith.constant 2048 : i32
    %26 = arith.cmpi sle, %25, %c2048_i32_10 : i32
    %27 = arith.extui %26 : i1 to i32
    %c0_i32_11 = arith.constant 0 : i32
    %28 = arith.cmpi ne, %27, %c0_i32_11 : i32
    scf.if %28 {
      %c0_13 = arith.constant 0 : index
      %c0_14 = arith.constant 0 : index
      %32 = vector.load %arg4[%c0_13, %c0_14] : memref<8x128xf32, #tpu.memory_space<vmem>>, vector<8x128xf32>
      %33 = vector.shape_cast %21 : vector<16x128xf32> to vector<2x8x128xf32>
      %cst_15 = arith.constant dense<0.000000e+00> : vector<8x128xf32>
      %34 = vector.multi_reduction <add>, %33, %cst_15 [0] : vector<2x8x128xf32> to vector<8x128xf32>
      %35 = arith.addf %32, %34 : vector<8x128xf32>
      %c0_16 = arith.constant 0 : index
      %c0_17 = arith.constant 0 : index
      %36 = vector.load %arg4[%c0_16, %c0_17] : memref<8x128xf32, #tpu.memory_space<vmem>>, vector<8x128xf32>
      tpu.vector_store %arg4[%c0_16, %c0_17], %35 {strides = array<i32>} : memref<8x128xf32, #tpu.memory_space<vmem>>, vector<8x128xf32>,
    } else {
    }
    %true = arith.constant true
    %29 = arith.xori %26, %true : i1
    %30 = arith.extui %29 : i1 to i32
    %c0_i32_12 = arith.constant 0 : i32
    %31 = arith.cmpi ne, %30, %c0_i32_12 : i32
    scf.if %31 {
      %32 = tpu.iota {dimensions = array<i32: 0>} : vector<16x128xi32>
      %33 = tpu.iota {dimensions = array<i32: 1>} : vector<16x128xi32>
      %c2048_i32_13 = arith.constant 2048 : i32
      %34 = arith.muli %23, %c2048_i32_13 : i32
      %c128_i32 = arith.constant 128 : i32
      %35 = vector.broadcast %c128_i32 : i32 to vector<16x128xi32>
      %36 = arith.muli %32, %35 : vector<16x128xi32>
      %37 = vector.broadcast %34 : i32 to vector<16x128xi32>
      %38 = arith.addi %37, %36 : vector<16x128xi32>
      %39 = arith.addi %38, %33 : vector<16x128xi32>
      %c2048_i32_14 = arith.constant 2048 : i32
      %40 = vector.broadcast %c2048_i32_14 : i32 to vector<16x128xi32>
      %41 = arith.cmpi slt, %39, %40 : vector<16x128xi32>
      %cst_15 = arith.constant 0.000000e+00 : f32
      %42 = vector.broadcast %cst_15 : f32 to vector<16x128xf32>
      %43 = arith.select %41, %21, %42 : vector<16x128xi1>, vector<16x128xf32>
      %c0_16 = arith.constant 0 : index
      %c0_17 = arith.constant 0 : index
      %44 = vector.load %arg4[%c0_16, %c0_17] : memref<8x128xf32, #tpu.memory_space<vmem>>, vector<8x128xf32>
      %45 = vector.shape_cast %43 : vector<16x128xf32> to vector<2x8x128xf32>
      %cst_18 = arith.constant dense<0.000000e+00> : vector<8x128xf32>
      %46 = vector.multi_reduction <add>, %45, %cst_18 [0] : vector<2x8x128xf32> to vector<8x128xf32>
      %47 = arith.addf %44, %46 : vector<8x128xf32>
      %c0_19 = arith.constant 0 : index
      %c0_20 = arith.constant 0 : index
      %48 = vector.load %arg4[%c0_19, %c0_20] : memref<8x128xf32, #tpu.memory_space<vmem>>, vector<8x128xf32>
      tpu.vector_store %arg4[%c0_19, %c0_20], %47 {strides = array<i32>} : memref<8x128xf32, #tpu.memory_space<vmem>>, vector<8x128xf32>,
    } else {
    }
    return
  }
  func.func @transform_0(%arg0: i32, %arg1: i32) -> (i32, i32) {
    %c1_i32 = arith.constant 1 : i32
    %0 = arith.muli %arg0, %c1_i32 : i32
    %1 = arith.addi %0, %arg1 : i32
    %c0_i32 = arith.constant 0 : i32
    %c0_i32_0 = arith.constant 0 : i32
    return %1, %c0_i32 : i32, i32
  }
  func.func @transform_1(%arg0: i32, %arg1: i32) -> (i32, i32) {
    %c1_i32 = arith.constant 1 : i32
    %0 = arith.muli %arg0, %c1_i32 : i32
    %1 = arith.addi %0, %arg1 : i32
    %c0_i32 = arith.constant 0 : i32
    %c0_i32_0 = arith.constant 0 : i32
    return %1, %c0_i32 : i32, i32
  }
  func.func @transform_2(%arg0: i32, %arg1: i32) -> (i32, i32) {
    %c0_i32 = arith.constant 0 : i32
    %c0_i32_0 = arith.constant 0 : i32
    return %arg0, %c0_i32 : i32, i32
  }
}

</mosaic_0001>

<llo_original>
// kernel: tpu_custom_call.1
$region0: #{tpu_custom_call.1}
  #allocation0 [shape = 'u32[]', space=smem, size = 0x4, offset = 0x4, fixed_abs, tag = 'smem constant byte address 0x4 - core index']
  #allocation1 [shape = 'u32[72,128]{1,0:T(1,128)}', space=vmem, size = 0x9000, scoped, tag = 'internal scratch']
  %s0 = inlined_call_operand.hbm [shape: f32[16,128], index: 0, kind: input, shape index: {}]
  %s1 = inlined_call_operand.hbm [shape: f32[16,128], index: 1, kind: input, shape index: {}]
  %s2 = inlined_call_operand.hbm [shape: f32[8,128], index: 2, kind: output, shape index: {}]
  %s3 = sld [smem:[#allocation0]]
  $region38: #{tpu_custom_call.1} parent=0
    _
  %s5 = ssub.s32 1, %s3
  %s6 = scalar_select 0, %s5, %s3
  $region1: #{tpu_custom_call.1} parent=0
    #allocation2 [shape = 'u8[8192]{0}', space=vmem, size = 0x2000, scoped, tag = 'input window, operand 0, single buffered']
    #allocation3 [shape = 's32[1]{0}', space=sflag, size = 0x4, scoped, tag = 'scoped memory for tpu_custom_call.1']
    #allocation4 [shape = 's32[1]{0}', space=sflag, size = 0x4, scoped, tag = 'scoped memory for tpu_custom_call.1']
    #allocation5 [shape = 'u8[8192]{0}', space=vmem, size = 0x2000, scoped, tag = 'input window, operand 1, single buffered']
    #allocation6 [shape = 's32[1]{0}', space=sflag, size = 0x4, scoped, tag = 'scoped memory for tpu_custom_call.1']
    #allocation7 [shape = 'u8[4096]{0}', space=vmem, size = 0x1000, scoped, tag = 'output window, operand 0, single buffered']
    %7 = vsyncpa [#allocation3], 0
    %8 = vsyncpa [#allocation6], 0
    %9 = vsyncpa [#allocation4], 0
    // Predicated region
    $region2: #{tpu_custom_call.1} parent=1 // pred_check
      _
    $region3: #{tpu_custom_call.1} parent=1 // pred_check_branch
      %11 = sbr.rel (0) target = $region5
    $region4: #{tpu_custom_call.1} parent=1 // pred_region
      %s12 = sadd.s32 0, 0
      %s13 = smul.u32 2, %s12
      %15 = vsyncadd [#allocation3], 0
      %s16 = smul.addr %s13, 8
      %s17 = scalar_lea.hbm %s0, %s16
      %s18 = sshll.u32 %s17, 4
      %s19 = int_to_ptr.hbm [resolvable:$true] %s18
      %s20 = sshll.u32 [#allocation2], 4
      %s21 = int_to_ptr.vmem [resolvable:$true] %s20
      %26 = dma.hbm_to_vmem [thread:$0]  %s19, 256, %s21, [#allocation3], 128, 128, 8
    $region5: #{tpu_custom_call.1} parent=1 // pred_fallthru
      _
    // Predicated region
    $region6: #{tpu_custom_call.1} parent=1 // pred_check
      _
    $region7: #{tpu_custom_call.1} parent=1 // pred_check_branch
      %28 = sbr.rel (0) target = $region9
    $region8: #{tpu_custom_call.1} parent=1 // pred_region
      %s29 = sadd.s32 0, 0
      %s30 = smul.u32 2, %s29
      %32 = vsyncadd [#allocation6], 0
      %s33 = smul.addr %s30, 8
      %s34 = scalar_lea.hbm %s1, %s33
      %s35 = sshll.u32 %s34, 4
      %s36 = int_to_ptr.hbm [resolvable:$true] %s35
      %s37 = sshll.u32 [#allocation5], 4
      %s38 = int_to_ptr.vmem [resolvable:$true] %s37
      %43 = dma.hbm_to_vmem [thread:$0]  %s36, 256, %s38, [#allocation6], 128, 128, 8
    $region9: #{tpu_custom_call.1} parent=1 // pred_fallthru
      _
    // Predicated region
    $region10: #{tpu_custom_call.1} parent=1 // pred_check
      _
    $region11: #{tpu_custom_call.1} parent=1 // pred_check_branch
      %45 = sbr.rel (0) target = $region13
    $region12: #{tpu_custom_call.1} parent=1 // pred_region
      %47 = dma.done [#allocation3], 256
    $region13: #{tpu_custom_call.1} parent=1 // pred_fallthru
      _
    // Predicated region
    $region14: #{tpu_custom_call.1} parent=1 // pred_check
      _
    $region15: #{tpu_custom_call.1} parent=1 // pred_check_branch
      %49 = sbr.rel (0) target = $region17
    $region16: #{tpu_custom_call.1} parent=1 // pred_region
      %51 = dma.done [#allocation6], 256
    $region17: #{tpu_custom_call.1} parent=1 // pred_fallthru
      _
    %s52 = sadd.s32 0, 0
    %s53 = smul.u32 2, %s52
    %s54 = sadd.s32 0, 0
    %s55 = smul.u32 2, %s54
    %p56 = scmp.eq.s32.totalorder 0, 0
    // Predicated region
    $region18: #{tpu_custom_call.1} parent=1 // pred_check
      %p57 = pneg %p56
    $region19: #{tpu_custom_call.1} parent=1 // pred_check_branch
      %59 = sbr.rel (%p57) target = $region21
    $region20: #{tpu_custom_call.1} parent=1 // pred_region
      %60 = vst [vmem:[#allocation7] sm:$0xff] 0.0
    $region21: #{tpu_custom_call.1} parent=1 // pred_fallthru
      _
    %v61 = vld [vmem:[#allocation2] sm:$0xff]
    %v62 = vld [vmem:[#allocation2 + $0x8] sm:$0xff]
    %v63 = vld [vmem:[#allocation5] sm:$0xff]
    %v64 = vld [vmem:[#allocation5 + $0x8] sm:$0xff]
    %v65 = vmax.f32 %v61, 1e-06
    %v66 = vmax.f32 %v62, 1e-06
    %v67 = vmin.f32 %v65, 0.999999
    %v68 = vmin.f32 %v66, 0.999999
    %v69 = vlog2.pop %v67
    %v70 = vmul.f32 %v69, 0.6931472
    %v71 = vlog2.pop %v68
    %v72 = vmul.f32 %v71, 0.6931472
    %v73 = vmul.f32 %v63, %v70
    %v74 = vmul.f32 %v64, %v72
    %v75 = vsub.f32 1.0, %v63
    %v76 = vsub.f32 1.0, %v64
    %v77 = vsub.f32 1.0, %v67
    %v78 = vsub.f32 1.0, %v68
    %v79 = vlog2.pop %v77
    %v80 = vmul.f32 %v79, 0.6931472
    %v81 = vlog2.pop %v78
    %v82 = vmul.f32 %v81, 0.6931472
    %v83 = vmul.f32 %v75, %v80
    %v84 = vmul.f32 %v76, %v82
    %v85 = vadd.f32 %v73, %v83
    %v86 = vadd.f32 %v74, %v84
    %s87 = sadd.s32 0, 0
    %s88 = sadd.s32 %s87, 1
    %s89 = smul.u32 %s88, 2048
    %p90 = scmp.le.s32.totalorder %s89, 2048
    // Predicated region
    $region22: #{tpu_custom_call.1} parent=1 // pred_check
      %p91 = pneg %p90
    $region23: #{tpu_custom_call.1} parent=1 // pred_check_branch
      %93 = sbr.rel (%p91) target = $region25
    $region24: #{tpu_custom_call.1} parent=1 // pred_region
      %v94 = vld [vmem:[#allocation7] sm:$0xff]
      %v95 = vadd.f32 %v85, %v86
      %v96 = vadd.f32 %v94, %v95
      %97 = vst [vmem:[#allocation7] sm:$0xff] %v96
    $region25: #{tpu_custom_call.1} parent=1 // pred_fallthru
      _
    %p98 = scmp.gt.s32.totalorder %s89, 2048
    // Predicated region
    $region26: #{tpu_custom_call.1} parent=1 // pred_check
      %p99 = pneg %p98
    $region27: #{tpu_custom_call.1} parent=1 // pred_check_branch
      %101 = sbr.rel (%p99) target = $region29
    $region28: #{tpu_custom_call.1} parent=1 // pred_region
      %v102 = vlaneseq
      %v103 = vshrl.u32 %v102, 7
      %v104 = vadd.s32 %v103, 8
      %v105 = vlaneseq
      %v106 = vand.u32 %v105, 127
      %s107 = smul.u32 %s87, 2048
      %v108 = vmul.u32 %v103, 128
      %v109 = vmul.u32 %v104, 128
      %v110 = vstv %s107
      %v111 = vadd.s32 %v110, %v108
      %v112 = vadd.s32 %v110, %v109
      %v113 = vadd.s32 %v111, %v106
      %v114 = vadd.s32 %v112, %v106
      %vm115 = vcmp.lt.s32.totalorder %v113, 2048
      %vm116 = vcmp.lt.s32.totalorder %v114, 2048
      %v117 = vsel %vm115, %v85, 0.0
      %v118 = vsel %vm116, %v86, 0.0
      %v119 = vld [vmem:[#allocation7] sm:$0xff]
      %v120 = vadd.f32 %v117, %v118
      %v121 = vadd.f32 %v119, %v120
      %122 = vst [vmem:[#allocation7] sm:$0xff] %v121
    $region29: #{tpu_custom_call.1} parent=1 // pred_fallthru
      _
    // Predicated region
    $region30: #{tpu_custom_call.1} parent=1 // pred_check
      _
    $region31: #{tpu_custom_call.1} parent=1 // pred_check_branch
      %124 = sbr.rel (0) target = $region33
    $region32: #{tpu_custom_call.1} parent=1 // pred_region
      %126 = vsyncadd [#allocation4], 0
      %s128 = sshll.u32 [#allocation7], 4
      %s129 = int_to_ptr.vmem [resolvable:$true] %s128
      %s130 = sshll.u32 %s2, 4
      %s131 = int_to_ptr.hbm [resolvable:$true] %s130
      %133 = dma.vmem_to_hbm [thread:$0]  %s129, 128, %s131, [#allocation4]
    $region33: #{tpu_custom_call.1} parent=1 // pred_fallthru
      _
    // Predicated region
    $region34: #{tpu_custom_call.1} parent=1 // pred_check
      _
    $region35: #{tpu_custom_call.1} parent=1 // pred_check_branch
      %135 = sbr.rel (0) target = $region37
    $region36: #{tpu_custom_call.1} parent=1 // pred_region
      %137 = dma.done [#allocation4], 128
    $region37: #{tpu_custom_call.1} parent=1 // pred_fallthru
      _
    %138 = vsyncpa [#allocation3], 1
    %139 = vsyncpa [#allocation6], 1
    %140 = vsyncpa [#allocation4], 1

</llo_original>
